<compile_context>
chip_gen: v7x
topology: tpu7x:2x2x1
jax: 0.10.0
libtpu: 0.0.40
codegen_flags: <defaults>
</compile_context>

<pallas_src>
import math

import jax
import jax.numpy as jnp
from jax.experimental import pallas as pl
from jax.experimental.pallas import tpu as pltpu


def _make_up_kernel(fuse_ki, precision):
    def up_kernel(x1_ref, x2_ref, w_ref, b_ref, o_ref):
        # x1_ref: (1, TH*W, Cin)
        # x2_ref: (1, TH, 2, W, 2*Cout)   free-reshape NHWC layout (h, ki, w, kj*Cout+co)
        # w_ref : (1, Cin, 4*Cout) [fused ki] or (2, Cin, 2*Cout)
        # b_ref : (1, 4*Cout) [fused] or (1, 2*Cout), f32
        # o_ref : (1, TH, 2, W, 2*Cout)
        _, th, _, w_dim, c2 = o_ref.shape
        x = x1_ref[0]                              # (TH*W, Cin)
        if x.dtype != w_ref.dtype:
            x = x.astype(w_ref.dtype)              # opt-in bf16 MXU path (f32 accumulate)
        bias = b_ref[...]                          # f32
        if fuse_ki:
            # One lane-dense matmul covering both ki taps: (TH*W, 4*Cout).
            y = jnp.dot(x, w_ref[0], preferred_element_type=jnp.float32,
                        precision=precision) + bias
            for ki in range(2):
                yk = y[:, ki * c2:(ki + 1) * c2].reshape(th, w_dim, c2)
                res = x2_ref[0, :, ki, :, :].astype(jnp.float32) + yk
                o_ref[0, :, ki, :, :] = res.astype(o_ref.dtype)
        else:
            for ki in range(2):                    # rare path: 2*Cout >= 128 and not 128-aligned
                y = jnp.dot(x, w_ref[ki], preferred_element_type=jnp.float32,
                            precision=precision) + bias
                # TODO(synk): if W % 8 != 0 this reshape splits the sublane dim
                # off-tile (XLU relayout); restructure the store for that case.
                yk = y.reshape(th, w_dim, c2)
                res = x2_ref[0, :, ki, :, :].astype(jnp.float32) + yk
                o_ref[0, :, ki, :, :] = res.astype(o_ref.dtype)
    return up_kernel


def _vmem_capacity_bytes():
    """Physical VMEM per TensorCore (128 MiB v5e/v6e, 64 MiB v7x)."""
    try:
        cap = getattr(pltpu.get_tpu_info(), "vmem_capacity_bytes", None)
        if cap:
            return int(cap)
    except Exception:
        pass
    return 64 * 1024 * 1024            # conservative (v7x-sized) fallback


def _choose_tile_h(N, H, W, Cin, Cout, x1_item, x2_item, out_item, vmem_cap):
    # Per x1-row-of-height bytes: Pallas double-buffers blocks (2x) plus the
    # in-kernel f32 temporaries (fused y, residual, x2 upcast).
    block_row = W * Cin * x1_item + 4 * W * Cout * x2_item + 4 * W * Cout * out_item
    temp_row = 48 * W * Cout
    row_bytes = max(1, 2 * block_row + temp_row)
    # Generation-aware budget: ~23 MiB on 128 MiB chips, ~11.5 MiB on 64 MiB v7x.
    budget = max(2 * 1024 * 1024, int(vmem_cap * 0.18))
    th = max(1, min(H, budget // row_bytes))
    g = 8 // math.gcd(W, 8)            # keep TH*W a multiple of 8 sublanes
    if th < H:
        th = (th // g) * g
        if th == 0:
            th = min(g, H)             # never fall back to full H ignoring the budget
    # v7x has 2 TensorCores: make sure the "parallel" grid has >= 2 steps.
    if N * pl.cdiv(H, th) < 2 and H >= 2 * g:
        th = min(th, max(g, ((H // 2) // g) * g))
    return min(th, H), row_bytes


def up_forward(x1, x2, w, b, *, use_bf16=False):
    """Forward of the PyTorch `up` module with NHWC activations.

    x1: (N, H, W, Cin); x2: (N, H2, W2, Cin//2)
    w : (Cin, Cout, 2, 2) PyTorch ConvTranspose2d weight; b: (Cout,)
    returns: (N, H2, W2, Cout) == x2 + pad(conv_transpose(x1))
    """
    N, H, W, Cin = x1.shape
    Cout = Cin // 2
    Ho, Wo = 2 * H, 2 * W
    _, H2, W2, _ = x2.shape
    diffY, diffX = H2 - Ho, W2 - Wo
    assert diffY >= 0 and diffX >= 0, "x2 must be spatially >= upsampled x1"
    py, px = diffY // 2, diffX // 2

    no_pad = (diffY == 0) and (diffX == 0)
    # TODO(synk): padded path still slices x2 + writes it back wrapper-side (one
    # extra x2 HBM round-trip); move (py, px) into the index_map and alias x2 to
    # the output to write the interior in place.
    x2_region = x2 if no_pad else x2[:, py:py + Ho, px:px + Wo, :]

    # Free reshapes only (no transposes).
    x2_r = x2_region.reshape(N, H, 2, W, 2 * Cout)
    x1_r = x1.reshape(N, H * W, Cin)

    c2 = 2 * Cout
    out_dtype = jnp.promote_types(x1.dtype, x2.dtype)
    w_dtype = jnp.bfloat16 if use_bf16 else jnp.promote_types(x1.dtype, w.dtype)
    precision = None if use_bf16 else jax.lax.Precision.HIGHEST

    # Fuse both ki taps into one matmul when the result split point is lane-tile
    # friendly (2*Cout < 128 or a multiple of 128).
    fuse_ki = (c2 < 128) or (c2 % 128 == 0)
    if fuse_ki:
        # Columns ordered (ki, kj, co): one (Cin, 4*Cout) lane-dense RHS.
        w_k = jnp.transpose(w, (0, 2, 3, 1)).reshape(1, Cin, 4 * Cout).astype(w_dtype)
        b2 = jnp.tile(b.astype(jnp.float32), 4).reshape(1, 4 * Cout)
    else:
        # Per-ki weights, columns ordered (kj, co).
        w_k = jnp.transpose(w, (2, 0, 3, 1)).reshape(2, Cin, 2 * Cout).astype(w_dtype)
        b2 = jnp.tile(b.astype(jnp.float32), 2).reshape(1, 2 * Cout)
    nk, _, ncols = w_k.shape

    vmem_cap = _vmem_capacity_bytes()
    th, row_bytes = _choose_tile_h(
        N, H, W, Cin, Cout,
        jnp.dtype(x1.dtype).itemsize, jnp.dtype(x2.dtype).itemsize,
        jnp.dtype(out_dtype).itemsize, vmem_cap)
    n_t = pl.cdiv(H, th)

    vmem_limit = min(int(vmem_cap * 0.6), 100 * 1024 * 1024)
    vmem_limit = min(vmem_cap, max(vmem_limit, th * row_bytes + (2 << 20)))

    flops = 2 * N * H * W * Cin * 4 * Cout + 2 * N * Ho * Wo * Cout
    bytes_accessed = (x1_r.size * jnp.dtype(x1.dtype).itemsize
                      + x2_r.size * jnp.dtype(x2.dtype).itemsize
                      + x2_r.size * jnp.dtype(out_dtype).itemsize
                      + w_k.size * jnp.dtype(w_k.dtype).itemsize
                      + b2.size * 4)

    out_r = pl.pallas_call(
        _make_up_kernel(fuse_ki, precision),
        out_shape=jax.ShapeDtypeStruct((N, H, 2, W, c2), out_dtype),
        grid=(N, n_t),
        in_specs=[
            pl.BlockSpec((1, th * W, Cin), lambda n, i: (n, i, 0)),
            pl.BlockSpec((1, th, 2, W, c2), lambda n, i: (n, i, 0, 0, 0)),
            pl.BlockSpec((nk, Cin, ncols), lambda n, i: (0, 0, 0)),
            pl.BlockSpec((1, ncols), lambda n, i: (0, 0)),
        ],
        out_specs=pl.BlockSpec((1, th, 2, W, c2),
                               lambda n, i: (n, i, 0, 0, 0)),
        compiler_params=pltpu.CompilerParams(
            dimension_semantics=("parallel", "parallel"),
            vmem_limit_bytes=int(vmem_limit)),
        cost_estimate=pl.CostEstimate(flops=flops, transcendentals=0,
                                      bytes_accessed=bytes_accessed),
    )(x1_r, x2_r, w_k, b2)

    sum_region = out_r.reshape(N, Ho, Wo, Cout)      # free reshape back to NHWC
    if no_pad:
        return sum_region
    # Padding fallback: write the overlapped region back into x2's border.
    return x2.astype(out_dtype).at[:, py:py + Ho, px:px + Wo, :].set(sum_region)


def up_reference(x1, x2, w, b):
    """Pure-JAX reference of the PyTorch forward (NHWC)."""
    N, H, W, Cin = x1.shape
    Cout = Cin // 2
    y_blk = jnp.einsum('nhwc,cokl->nklhwo', x1, w,
                       precision=jax.lax.Precision.HIGHEST) + b   # (N,2,2,H,W,Cout)
    y_up = y_blk.transpose(0, 3, 1, 4, 2, 5).reshape(N, 2 * H, 2 * W, Cout)
    diffY = x2.shape[1] - 2 * H
    diffX = x2.shape[2] - 2 * W
    py, px = diffY // 2, diffX // 2
    y_pad = jnp.pad(y_up, ((0, 0), (py, diffY - py), (px, diffX - px), (0, 0)))
    return x2 + y_pad


if __name__ == "__main__":
    key = jax.random.PRNGKey(0)
    k1, k2, k3, k4, k5, k6, k7, k8, k9 = jax.random.split(key, 9)

    # Case 1: fused-ki path (2*Cout < 128), no padding. batch=2, in_ch=8, 8x8 -> 16x16.
    N, Cin, H, W = 2, 8, 8, 8
    Cout = Cin // 2
    x1 = jax.random.normal(k1, (N, H, W, Cin), dtype=jnp.float32)
    x2 = jax.random.normal(k2, (N, 2 * H, 2 * W, Cout), dtype=jnp.float32)
    w = 0.1 * jax.random.normal(k3, (Cin, Cout, 2, 2), dtype=jnp.float32)
    b = 0.1 * jax.random.normal(k4, (Cout,), dtype=jnp.float32)

    out = up_forward(x1, x2, w, b)
    jax.block_until_ready(out)
    ref = up_reference(x1, x2, w, b)
    assert out.shape == ref.shape
    assert jnp.allclose(out, ref, atol=1e-5, rtol=1e-5), "mismatch (f32, no-pad)"

    # Case 2: x2 larger than 2*x1 (exercises the F.pad / border path).
    x2p = jax.random.normal(k5, (N, 2 * H + 2, 2 * W + 2, Cout), dtype=jnp.float32)
    outp = up_forward(x1, x2p, w, b)
    jax.block_until_ready(outp)
    refp = up_reference(x1, x2p, w, b)
    assert outp.shape == refp.shape
    assert jnp.allclose(outp, refp, atol=1e-5, rtol=1e-5), "mismatch (pad case)"

    # Case 3: opt-in bf16 MXU path (looser tolerance).
    outb = up_forward(x1, x2, w, b, use_bf16=True)
    jax.block_until_ready(outb)
    assert jnp.allclose(outb, ref, atol=3e-2, rtol=3e-2), "mismatch (bf16 path)"

    # Case 4: non-fused ki path (2*Cout >= 128, not 128-aligned) with N == 1
    # (also exercises the >=2 parallel grid-steps guarantee for v7x).
    N2, Cin2, Hs, Ws = 1, 160, 8, 8
    Cout2 = Cin2 // 2
    x1b = jax.random.normal(k6, (N2, Hs, Ws, Cin2), dtype=jnp.float32)
    x2b = jax.random.normal(k7, (N2, 2 * Hs, 2 * Ws, Cout2), dtype=jnp.float32)
    wb = 0.05 * jax.random.normal(k8, (Cin2, Cout2, 2, 2), dtype=jnp.float32)
    bb = 0.05 * jax.random.normal(k9, (Cout2,), dtype=jnp.float32)
    outc = up_forward(x1b, x2b, wb, bb)
    jax.block_until_ready(outc)
    refc = up_reference(x1b, x2b, wb, bb)
    assert jnp.allclose(outc, refc, atol=1e-4, rtol=1e-4), "mismatch (non-fused)"

    print("KERNEL_OK")
</pallas_src>

<mosaic_0001>
module attributes {stable_mosaic.version = 11 : i64} {
  func.func @up_kernel(%arg0: i32, %arg1: i32, %arg2: memref<1x64x8xf32, #tpu.memory_space<vmem>>, %arg3: memref<1x8x2x8x8xf32, #tpu.memory_space<vmem>>, %arg4: memref<1x8x16xf32, #tpu.memory_space<vmem>>, %arg5: memref<1x16xf32, #tpu.memory_space<vmem>>, %arg6: memref<1x8x2x8x8xf32, #tpu.memory_space<vmem>>) attributes {dimension_semantics = [#tpu.dimension_semantics<parallel>, #tpu.dimension_semantics<parallel>], iteration_bounds = array<i64: 2, 1>, scalar_prefetch = 0 : i64, scratch_operands = 0 : i64, tpu.core_type = #tpu.core_type<tc>, window_params = [{transform_indices = @transform_0, window_bounds = array<i64: 1, 64, 8>}, {transform_indices = @transform_1, window_bounds = array<i64: 1, 8, 2, 8, 8>}, {pipeline_mode = #tpu.pipeline_mode<synchronous>, transform_indices = @transform_2, window_bounds = array<i64: 1, 8, 16>}, {pipeline_mode = #tpu.pipeline_mode<synchronous>, transform_indices = @transform_3, window_bounds = array<i64: 1, 16>}, {transform_indices = @transform_4, window_bounds = array<i64: 1, 8, 2, 8, 8>}]} {
    %c0 = arith.constant 0 : index
    %c0_0 = arith.constant 0 : index
    %c0_1 = arith.constant 0 : index
    %0 = vector.load %arg2[%c0, %c0_0, %c0_1] : memref<1x64x8xf32, #tpu.memory_space<vmem>>, vector<1x64x8xf32>
    %1 = vector.shape_cast %0 : vector<1x64x8xf32> to vector<64x8xf32>
    %c0_2 = arith.constant 0 : index
    %c0_3 = arith.constant 0 : index
    %2 = vector.load %arg5[%c0_2, %c0_3] : memref<1x16xf32, #tpu.memory_space<vmem>>, vector<1x16xf32>
    %c0_4 = arith.constant 0 : index
    %c0_5 = arith.constant 0 : index
    %c0_6 = arith.constant 0 : index
    %3 = vector.load %arg4[%c0_4, %c0_5, %c0_6] : memref<1x8x16xf32, #tpu.memory_space<vmem>>, vector<1x8x16xf32>
    %4 = vector.shape_cast %3 : vector<1x8x16xf32> to vector<8x16xf32>
    %cst = arith.constant dense<0.000000e+00> : vector<64x16xf32>
    %5 = tpu.matmul %1, %4, %cst {dimension_numbers = #tpu.dot_dimension_numbers<[1], [0], [0], [1], [0, 0, 1, 1], [], []>, precision = #tpu.contract_precision<fp32>} : vector<64x8xf32>, vector<8x16xf32>, vector<64x16xf32> -> vector<64x16xf32>
    %6 = vector.broadcast %2 : vector<1x16xf32> to vector<64x16xf32>
    %7 = arith.addf %5, %6 : vector<64x16xf32>
    %8 = vector.extract_strided_slice %7 {offsets = [0, 0], sizes = [64, 8], strides = [1, 1]} : vector<64x16xf32> to vector<64x8xf32>
    %9 = vector.shape_cast %8 : vector<64x8xf32> to vector<8x8x8xf32>
    %c0_7 = arith.constant 0 : index
    %c0_8 = arith.constant 0 : index
    %c0_9 = arith.constant 0 : index
    %c0_10 = arith.constant 0 : index
    %c0_11 = arith.constant 0 : index
    %10 = vector.load %arg3[%c0_7, %c0_8, %c0_9, %c0_10, %c0_11] : memref<1x8x2x8x8xf32, #tpu.memory_space<vmem>>, vector<1x8x1x8x8xf32>
    %11 = vector.shape_cast %10 : vector<1x8x1x8x8xf32> to vector<8x8x8xf32>
    %12 = arith.addf %11, %9 : vector<8x8x8xf32>
    %c0_12 = arith.constant 0 : index
    %c0_13 = arith.constant 0 : index
    %c0_14 = arith.constant 0 : index
    %c0_15 = arith.constant 0 : index
    %c0_16 = arith.constant 0 : index
    %13 = vector.load %arg6[%c0_12, %c0_13, %c0_14, %c0_15, %c0_16] : memref<1x8x2x8x8xf32, #tpu.memory_space<vmem>>, vector<1x8x1x8x8xf32>
    %14 = vector.shape_cast %13 : vector<1x8x1x8x8xf32> to vector<8x8x8xf32>
    %15 = vector.shape_cast %12 : vector<8x8x8xf32> to vector<1x8x1x8x8xf32>
    tpu.vector_store %arg6[%c0_12, %c0_13, %c0_14, %c0_15, %c0_16], %15 {strides = array<i32>} : memref<1x8x2x8x8xf32, #tpu.memory_space<vmem>>, vector<1x8x1x8x8xf32>,
    %16 = vector.extract_strided_slice %7 {offsets = [0, 8], sizes = [64, 8], strides = [1, 1]} : vector<64x16xf32> to vector<64x8xf32>
    %17 = vector.shape_cast %16 : vector<64x8xf32> to vector<8x8x8xf32>
    %c0_17 = arith.constant 0 : index
    %c0_18 = arith.constant 0 : index
    %c1 = arith.constant 1 : index
    %c0_19 = arith.constant 0 : index
    %c0_20 = arith.constant 0 : index
    %18 = vector.load %arg3[%c0_17, %c0_18, %c1, %c0_19, %c0_20] : memref<1x8x2x8x8xf32, #tpu.memory_space<vmem>>, vector<1x8x1x8x8xf32>
    %19 = vector.shape_cast %18 : vector<1x8x1x8x8xf32> to vector<8x8x8xf32>
    %20 = arith.addf %19, %17 : vector<8x8x8xf32>
    %c0_21 = arith.constant 0 : index
    %c0_22 = arith.constant 0 : index
    %c1_23 = arith.constant 1 : index
    %c0_24 = arith.constant 0 : index
    %c0_25 = arith.constant 0 : index
    %21 = vector.load %arg6[%c0_21, %c0_22, %c1_23, %c0_24, %c0_25] : memref<1x8x2x8x8xf32, #tpu.memory_space<vmem>>, vector<1x8x1x8x8xf32>
    %22 = vector.shape_cast %21 : vector<1x8x1x8x8xf32> to vector<8x8x8xf32>
    %23 = vector.shape_cast %20 : vector<8x8x8xf32> to vector<1x8x1x8x8xf32>
    tpu.vector_store %arg6[%c0_21, %c0_22, %c1_23, %c0_24, %c0_25], %23 {strides = array<i32>} : memref<1x8x2x8x8xf32, #tpu.memory_space<vmem>>, vector<1x8x1x8x8xf32>,
    return
  }
  func.func @transform_0(%arg0: i32, %arg1: i32) -> (i32, i32, i32) {
    %c0_i32 = arith.constant 0 : i32
    %c0_i32_0 = arith.constant 0 : i32
    return %arg0, %arg1, %c0_i32 : i32, i32, i32
  }
  func.func @transform_1(%arg0: i32, %arg1: i32) -> (i32, i32, i32, i32, i32) {
    %c0_i32 = arith.constant 0 : i32
    %c0_i32_0 = arith.constant 0 : i32
    %c0_i32_1 = arith.constant 0 : i32
    %c0_i32_2 = arith.constant 0 : i32
    return %arg0, %arg1, %c0_i32, %c0_i32_0, %c0_i32_1 : i32, i32, i32, i32, i32
  }
  func.func @transform_2(%arg0: i32, %arg1: i32) -> (i32, i32, i32) {
    %c0_i32 = arith.constant 0 : i32
    %c0_i32_0 = arith.constant 0 : i32
    %c0_i32_1 = arith.constant 0 : i32
    %c0_i32_2 = arith.constant 0 : i32
    return %c0_i32, %c0_i32_0, %c0_i32_1 : i32, i32, i32
  }
  func.func @transform_3(%arg0: i32, %arg1: i32) -> (i32, i32) {
    %c0_i32 = arith.constant 0 : i32
    %c0_i32_0 = arith.constant 0 : i32
    %c0_i32_1 = arith.constant 0 : i32
    return %c0_i32, %c0_i32_0 : i32, i32
  }
  func.func @transform_4(%arg0: i32, %arg1: i32) -> (i32, i32, i32, i32, i32) {
    %c0_i32 = arith.constant 0 : i32
    %c0_i32_0 = arith.constant 0 : i32
    %c0_i32_1 = arith.constant 0 : i32
    %c0_i32_2 = arith.constant 0 : i32
    return %arg0, %arg1, %c0_i32, %c0_i32_0, %c0_i32_1 : i32, i32, i32, i32, i32
  }
}

</mosaic_0001>

<llo_original>
// kernel: tpu_custom_call.1
$region0: #{tpu_custom_call.1}
  #allocation0 [shape = 'u32[]', space=smem, size = 0x4, offset = 0x4, fixed_abs, tag = 'smem constant byte address 0x4 - core index']
  #allocation1 [shape = 'u32[144,128]{1,0:T(1,128)}', space=vmem, size = 0x12000, scoped, tag = 'internal scratch']
  %s0 = inlined_call_operand.vmem [shape: f32[2,64,8], index: 0, kind: input, shape index: {}]
  %s1 = inlined_call_operand.hbm [shape: f32[2,8,2,8,8], index: 1, kind: input, shape index: {}]
  %s2 = inlined_call_operand.vmem [shape: f32[1,8,16], index: 2, kind: input, shape index: {}]
  %s3 = inlined_call_operand.vmem [shape: f32[1,16], index: 3, kind: input, shape index: {}]
  %s4 = inlined_call_operand.hbm [shape: f32[2,8,2,8,8], index: 4, kind: output, shape index: {}]
  %s5 = sld [smem:[#allocation0]]
  $region53: #{tpu_custom_call.1} parent=0
    _
  %s7 = ssub.s32 1, %s5
  %s8 = scalar_select 0, %s7, %s5
  $region1: #{tpu_custom_call.1} parent=0
    #allocation2 [shape = 'u8[131072]{0}', space=vmem, size = 0x20000, scoped, tag = 'input window, operand 1']
    #allocation3 [shape = 's32[2]{0}', space=sflag, size = 0x8, scoped, tag = 'scoped memory for tpu_custom_call.1']
    #allocation4 [shape = 's32[2]{0}', space=sflag, size = 0x8, scoped, tag = 'scoped memory for tpu_custom_call.1']
    #allocation5 [shape = 'u8[131072]{0}', space=vmem, size = 0x20000, scoped, tag = 'output window, operand 0']
    %9 = vsyncpa [#allocation3], 0
    %s10 = scalar_lea.sflag [#allocation3], 1
    %11 = vsyncpa %s10, 0
    %12 = vsyncpa [#allocation4], 0
    %s13 = scalar_lea.sflag [#allocation4], 1
    %14 = vsyncpa %s13, 0
    loop: start=0, step=1, limit=4
    $region2: #{tpu_custom_call.1} parent=1 // loop_pre_header
      _
    $region3: #{tpu_custom_call.1} parent=1 // loop_header
      %s16 = sphi 0, %s20
      %p17 = scmp.ge.s32.totalorder %s16, 4
      %s23 = sphi 0, %s35
      %s24 = sphi 0, %s31
      %s25 = sphi 0, %s23
      %s26 = sphi 0, %s24
      %s27 = sphi 0, %s25
      %s28 = sphi 0, %s26
      %s40 = sphi 0, %s42
      %s43 = sphi 0, %s40
      %s44 = sphi 0, %s43
      %s60 = sphi 0, %s44
      %s68 = sphi 0, %s70
      %s71 = sphi 0, %s68
      %s72 = sphi 0, %s71
      %s88 = sphi 0, %s72
      %s92 = sphi 0, %s92
      %s94 = sphi 0, %s92
      %s95 = sphi 0, %s94
      %s109 = sphi 0, %s95
      %s113 = sphi 0, %s113
      %s115 = sphi 0, %s113
      %s116 = sphi 0, %s115
      %s130 = sphi 0, %s116
      %s138 = sphi 0, %s140
      %s141 = sphi 0, %s138
      %s142 = sphi 0, %s141
      %s158 = sphi 0, %s142
    $region4: #{tpu_custom_call.1} parent=1 // loop_header_branch
      %19 = sbr.rel (%p17) target = $region8
    $region5: #{tpu_custom_call.1} parent=1 // loop_body
      %s21 = ssub.s32 %s16, 1
      %s22 = ssub.s32 %s16, 2
      %s29 = sadd.s32 1, %s24
      %p30 = scmp.ge.s32.totalorder %s29, 1
      %s31 = scalar_select %p30, 0, %s29
      %s32 = sadd.s32 1, %s23
      %s33 = scalar_select %p30, %s32, %s23
      %p34 = scmp.ge.s32.totalorder %s33, 2
      %s35 = scalar_select %p34, 0, %s33
      %s36 = ssub.s32 %s23, %s35
      %s37 = ssub.s32 %s24, %s31
      %s38 = sor.u32 %s36, %s37
      %p39 = scmp.eq.s32.totalorder %s38, 0
      %s41 = sadd.s32 %s40, 1
      %s42 = scalar_select %p39, %s40, %s41
      %p45 = pneg %p39
      %p46 = scmp.eq.s32.totalorder %s16, 1
      %p47 = por %p45, %p46
      %p48 = scmp.ne.s32.totalorder %s40, %s43
      %p49 = scmp.eq.s32.totalorder %s16, 0
      %p50 = por %p48, %p49
      %p51 = scmp.ne.s32.totalorder %s40, %s43
      %p52 = scmp.eq.s32.totalorder %s21, 1
      %p53 = por %p51, %p52
      %p54 = scmp.ne.s32.totalorder %s43, %s44
      %p55 = scmp.eq.s32.totalorder %s21, 0
      %p56 = por %p54, %p55
      %p57 = scmp.ne.s32.totalorder %s43, %s44
      %p58 = scmp.eq.s32.totalorder %s22, 1
      %p59 = por %p57, %p58
      %p61 = scmp.ne.s32.totalorder %s44, %s60
      %p62 = scmp.eq.s32.totalorder %s22, 0
      %p63 = por %p61, %p62
      %s64 = ssub.s32 %s23, %s35
      %s65 = ssub.s32 %s24, %s31
      %s66 = sor.u32 %s64, %s65
      %p67 = scmp.eq.s32.totalorder %s66, 0
      %s69 = sadd.s32 %s68, 1
      %s70 = scalar_select %p67, %s68, %s69
      %p73 = pneg %p67
      %p74 = scmp.eq.s32.totalorder %s16, 1
      %p75 = por %p73, %p74
      %p76 = scmp.ne.s32.totalorder %s68, %s71
      %p77 = scmp.eq.s32.totalorder %s16, 0
      %p78 = por %p76, %p77
      %p79 = scmp.ne.s32.totalorder %s68, %s71
      %p80 = scmp.eq.s32.totalorder %s21, 1
      %p81 = por %p79, %p80
      %p82 = scmp.ne.s32.totalorder %s71, %s72
      %p83 = scmp.eq.s32.totalorder %s21, 0
      %p84 = por %p82, %p83
      %p85 = scmp.ne.s32.totalorder %s71, %s72
      %p86 = scmp.eq.s32.totalorder %s22, 1
      %p87 = por %p85, %p86
      %p89 = scmp.ne.s32.totalorder %s72, %s88
      %p90 = scmp.eq.s32.totalorder %s22, 0
      %p91 = por %p89, %p90
      %s93 = sadd.s32 %s92, 1
      %p96 = scmp.eq.s32.totalorder %s16, 1
      %p97 = scmp.ne.s32.totalorder %s92, %s94
      %p98 = scmp.eq.s32.totalorder %s16, 0
      %p99 = por %p97, %p98
      %p100 = scmp.ne.s32.totalorder %s92, %s94
      %p101 = scmp.eq.s32.totalorder %s21, 1
      %p102 = por %p100, %p101
      %p103 = scmp.ne.s32.totalorder %s94, %s95
      %p104 = scmp.eq.s32.totalorder %s21, 0
      %p105 = por %p103, %p104
      %p106 = scmp.ne.s32.totalorder %s94, %s95
      %p107 = scmp.eq.s32.totalorder %s22, 1
      %p108 = por %p106, %p107
      %p110 = scmp.ne.s32.totalorder %s95, %s109
      %p111 = scmp.eq.s32.totalorder %s22, 0
      %p112 = por %p110, %p111
      %s114 = sadd.s32 %s113, 1
      %p117 = scmp.eq.s32.totalorder %s16, 1
      %p118 = scmp.ne.s32.totalorder %s113, %s115
      %p119 = scmp.eq.s32.totalorder %s16, 0
      %p120 = por %p118, %p119
      %p121 = scmp.ne.s32.totalorder %s113, %s115
      %p122 = scmp.eq.s32.totalorder %s21, 1
      %p123 = por %p121, %p122
      %p124 = scmp.ne.s32.totalorder %s115, %s116
      %p125 = scmp.eq.s32.totalorder %s21, 0
      %p126 = por %p124, %p125
      %p127 = scmp.ne.s32.totalorder %s115, %s116
      %p128 = scmp.eq.s32.totalorder %s22, 1
      %p129 = por %p127, %p128
      %p131 = scmp.ne.s32.totalorder %s116, %s130
      %p132 = scmp.eq.s32.totalorder %s22, 0
      %p133 = por %p131, %p132
      %s134 = ssub.s32 %s23, %s35
      %s135 = ssub.s32 %s24, %s31
      %s136 = sor.u32 %s134, %s135
      %p137 = scmp.eq.s32.totalorder %s136, 0
      %s139 = sadd.s32 %s138, 1
      %s140 = scalar_select %p137, %s138, %s139
      %p143 = pneg %p137
      %p144 = scmp.eq.s32.totalorder %s16, 1
      %p145 = por %p143, %p144
      %p146 = scmp.ne.s32.totalorder %s138, %s141
      %p147 = scmp.eq.s32.totalorder %s16, 0
      %p148 = por %p146, %p147
      %p149 = scmp.ne.s32.totalorder %s138, %s141
      %p150 = scmp.eq.s32.totalorder %s21, 1
      %p151 = por %p149, %p150
      %p152 = scmp.ne.s32.totalorder %s141, %s142
      %p153 = scmp.eq.s32.totalorder %s21, 0
      %p154 = por %p152, %p153
      %p155 = scmp.ne.s32.totalorder %s141, %s142
      %p156 = scmp.eq.s32.totalorder %s22, 1
      %p157 = por %p155, %p156
      %p159 = scmp.ne.s32.totalorder %s142, %s158
      %p160 = scmp.eq.s32.totalorder %s22, 0
      %p161 = por %p159, %p160
      %p162 = scmp.le.s32.totalorder 1, %s16
      %p163 = scmp.lt.s32.totalorder %s16, 3
      %p164 = pnand %p162, %p163
      %p165 = pneg %p164
      // Predicated region
      $region9: #{tpu_custom_call.1} parent=5 // pred_check
        _
      $region10: #{tpu_custom_call.1} parent=5 // pred_check_branch
        %167 = sbr.rel (%p164) target = $region12
      $region11: #{tpu_custom_call.1} parent=5 // pred_region
        %s168 = ssub.s32 %s16, 1
        // Predicated region
        $region13: #{tpu_custom_call.1} parent=11 // pred_check
          %p169 = pneg %p105
        $region14: #{tpu_custom_call.1} parent=11 // pred_check_branch
          %171 = sbr.rel (%p169) target = $region16
        $region15: #{tpu_custom_call.1} parent=11 // pred_region
          _
        $region16: #{tpu_custom_call.1} parent=11 // pred_fallthru
          _
        // Predicated region
        $region17: #{tpu_custom_call.1} parent=11 // pred_check
          %p172 = pneg %p126
        $region18: #{tpu_custom_call.1} parent=11 // pred_check_branch
          %174 = sbr.rel (%p172) target = $region20
        $region19: #{tpu_custom_call.1} parent=11 // pred_region
          _
        $region20: #{tpu_custom_call.1} parent=11 // pred_fallthru
          _
      $region12: #{tpu_custom_call.1} parent=5 // pred_fallthru
        _
      %p175 = scmp.lt.s32.totalorder %s16, 2
      // Predicated region
      $region21: #{tpu_custom_call.1} parent=5 // pred_check
        %p176 = pneg %p175
      $region22: #{tpu_custom_call.1} parent=5 // pred_check_branch
        %178 = sbr.rel (%p176) target = $region24
      $region23: #{tpu_custom_call.1} parent=5 // pred_region
        // Predicated region
        $region25: #{tpu_custom_call.1} parent=23 // pred_check
          %p179 = pneg %p50
        $region26: #{tpu_custom_call.1} parent=23 // pred_check_branch
          %181 = sbr.rel (%p179) target = $region28
        $region27: #{tpu_custom_call.1} parent=23 // pred_region
          %s182 = smul.u32 8, %s24
          %p183 = scmp.lt.s32.totalorder %s23, 1
          %s184 = scalar_select %p183, %s23, 1
          %p185 = scmp.lt.s32.totalorder %s182, 7
          %s186 = scalar_select %p185, %s182, 7
          %s187 = smul.addr %s184, 8
          %s188 = sadd.s32 %s186, %s187
          %s189 = smul.addr %s188, 8
          %s190 = scalar_lea.vmem %s0, %s189
          %s191 = smul.u32 8, %s24
        $region28: #{tpu_custom_call.1} parent=23 // pred_fallthru
          _
        // Predicated region
        $region29: #{tpu_custom_call.1} parent=23 // pred_check
          %p192 = pneg %p78
        $region30: #{tpu_custom_call.1} parent=23 // pred_check_branch
          %194 = sbr.rel (%p192) target = $region32
        $region31: #{tpu_custom_call.1} parent=23 // pred_region
          %s195 = sand.u32 %s68, 1
          %s196 = scalar_lea.sflag [#allocation3], %s195
          %s197 = sand.u32 %s68, 1
          %s198 = smul.addr %s197, 128
          %s199 = scalar_lea.vmem [#allocation2], %s198
          %s200 = smul.u32 8, %s24
          %s202 = ssub.s32 2048, 2048
          %203 = vsyncadd %s196, %s202
          %s204 = smul.addr %s200, 2
          %s205 = smul.addr %s23, 16
          %s206 = sadd.s32 %s204, %s205
          %s207 = smul.addr %s206, 128
          %s208 = scalar_lea.hbm %s1, %s207
          %s209 = sshll.u32 %s199, 4
          %s210 = int_to_ptr.vmem [resolvable:$true] %s209
          %215 = dma.hbm_to_vmem [thread:$0]  %s208, 2048, %s210, %s196, 128, 128, 8
        $region32: #{tpu_custom_call.1} parent=23 // pred_fallthru
          _
      $region24: #{tpu_custom_call.1} parent=5 // pred_fallthru
        _
      %p216 = scmp.le.s32.totalorder 1, %s16
      %p217 = scmp.lt.s32.totalorder %s16, 3
      %p218 = pnand %p216, %p217
      %p219 = pneg %p218
      // Predicated region
      $region33: #{tpu_custom_call.1} parent=5 // pred_check
        _
      $region34: #{tpu_custom_call.1} parent=5 // pred_check_branch
        %221 = sbr.rel (%p218) target = $region36
      $region35: #{tpu_custom_call.1} parent=5 // pred_region
        %s222 = ssub.s32 %s16, 1
        %s223 = sand.u32 %s71, 1
        %s224 = scalar_lea.sflag [#allocation3], %s223
        %s225 = sand.u32 %s71, 1
        %s226 = smul.addr %s225, 128
        %s227 = scalar_lea.vmem [#allocation2], %s226
        // Predicated region
        $region37: #{tpu_custom_call.1} parent=35 // pred_check
          %p228 = pneg %p84
        $region38: #{tpu_custom_call.1} parent=35 // pred_check_branch
          %230 = sbr.rel (%p228) target = $region40
        $region39: #{tpu_custom_call.1} parent=35 // pred_region
          %231 = dma.done %s224, 2048
        $region40: #{tpu_custom_call.1} parent=35 // pred_fallthru
          _
        %s232 = smul.u32 8, %s26
        %p233 = scmp.lt.s32.totalorder %s25, 1
        %s234 = scalar_select %p233, %s25, 1
        %p235 = scmp.lt.s32.totalorder %s232, 7
        %s236 = scalar_select %p235, %s232, 7
        %s237 = smul.addr %s234, 8
        %s238 = sadd.s32 %s236, %s237
        %s239 = smul.addr %s238, 8
        %s240 = scalar_lea.vmem %s0, %s239
        %p241 = pneg %p56
        %p242 = pneg %p53
        %s243 = sand.u32 %s71, 1
        %s244 = scalar_lea.sflag [#allocation3], %s243
        %s245 = sand.u32 %s71, 1
        %s246 = smul.addr %s245, 128
        %s247 = scalar_lea.vmem [#allocation2], %s246
        %p248 = pneg %p84
        %p249 = pneg %p81
        %p250 = pneg %p105
        %p251 = pneg %p102
        %p252 = pneg %p126
        %p253 = pneg %p123
        %p254 = pneg %p154
        %p255 = pneg %p151
        %s256 = sand.u32 %s141, 1
        %s257 = scalar_lea.sflag [#allocation4], %s256
        %s258 = sand.u32 %s141, 1
        %s259 = smul.addr %s258, 128
        %s260 = scalar_lea.vmem [#allocation5], %s259
        %s261 = smul.u32 8, %s26
        %p262 = scmp.lt.s32.totalorder %s25, 1
        %s263 = scalar_select %p262, %s25, 1
        %p264 = scmp.lt.s32.totalorder %s261, 7
        %s265 = scalar_select %p264, %s261, 7
        %s266 = smul.addr %s263, 8
        %s267 = sadd.s32 %s265, %s266
        %s268 = smul.addr %s267, 8
        %s269 = scalar_lea.vmem %s0, %s268
        %s270 = smul.u32 8, %s26
        %s271 = smul.u32 8, %s26
        %s272 = smul.u32 8, %s26
        %v273 = vld [vmem:[%s269] sm:$0xff]
        %v274 = vld [vmem:[%s269 + $0x8] sm:$0xff]
        %v275 = vld [vmem:[%s269 + $0x10] sm:$0xff]
        %v276 = vld [vmem:[%s269 + $0x18] sm:$0xff]
        %v277 = vld [vmem:[%s269 + $0x20] sm:$0xff]
        %v278 = vld [vmem:[%s269 + $0x28] sm:$0xff]
        %v279 = vld [vmem:[%s269 + $0x30] sm:$0xff]
        %v280 = vld [vmem:[%s269 + $0x38] sm:$0xff]
        %v281 = vld [vmem:[%s3] sm:$0x1]
        %v282 = vld [vmem:[%s2] sm:$0xff]
        %v284 = vlaneseq
        %v285 = vshrl.u32 %v284, 7
        %v286 = vsub.s32 0, %v285
        %v287 = vrot.slane %v281, %v286
        %vm289 = vcmask 64512
        %v291 = vsel %vm289, %v273, 0
        %v294 = vsel %vm289, %v274, 0
        %v297 = vsel %vm289, %v275, 0
        %v300 = vsel %vm289, %v276, 0
        %v303 = vsel %vm289, %v277, 0
        %v306 = vsel %vm289, %v278, 0
        %v309 = vsel %vm289, %v279, 0
        %v312 = vsel %vm289, %v280, 0
        %314 = vmatprep.subr.mxu0 0.0
        %v315 = vand.u32 %v282, 4294901760
        %316 = vmatpush1.msra.mxu0 %v315
        %317 = vmatprep.subr.mxu0 0.0
        %318 = vmatpush1.msra.mxu0 0.0
        %319 = vmatprep.subr.mxu0 0.0
        %320 = vmatpush1.msra.mxu0 0.0
        %321 = vmatprep.subr.mxu0 0.0
        %322 = vmatpush1.msra.mxu0 0.0
        %323 = vmatprep.subr.mxu0 0.0
        %324 = vmatpush1.msra.mxu0 0.0
        %325 = vmatprep.subr.mxu0 0.0
        %326 = vmatpush1.msra.mxu0 0.0
        %327 = vmatprep.subr.mxu0 0.0
        %328 = vmatpush1.msra.mxu0 0.0
        %329 = vmatprep.subr.mxu0 0.0
        %330 = vmatpush1.msra.mxu0 0.0
        %331 = vmatprep.subr.mxu0 0.0
        %332 = vmatpush1.msra.mxu0 0.0
        %333 = vmatprep.subr.mxu0 0.0
        %334 = vmatpush1.msra.mxu0 0.0
        %335 = vmatprep.subr.mxu0 0.0
        %336 = vmatpush1.msra.mxu0 0.0
        %337 = vmatprep.subr.mxu0 0.0
        %338 = vmatpush1.msra.mxu0 0.0
        %339 = vmatprep.subr.mxu0 0.0
        %340 = vmatpush1.msra.mxu0 0.0
        %341 = vmatprep.subr.mxu0 0.0
        %342 = vmatpush1.msra.mxu0 0.0
        %343 = vmatprep.subr.mxu0 0.0
        %344 = vmatpush1.msra.mxu0 0.0
        %345 = vmatprep.subr.mxu0 0.0
        %346 = vmatpush1.msra.mxu0 0.0
        %347 = vmatprep.subr.mxu0 0.0
        %348 = vmatpush1.msra.mxu0 0.0
        %349 = vmatprep.subr.mxu0 0.0
        %350 = vmatpush1.msra.mxu0 0.0
        %351 = vmatprep.subr.mxu0 0.0
        %352 = vmatpush1.msra.mxu0 0.0
        %353 = vmatprep.subr.mxu0 0.0
        %354 = vmatpush1.msra.mxu0 0.0
        %355 = vmatprep.subr.mxu0 0.0
        %356 = vmatpush1.msra.mxu0 0.0
        %357 = vmatprep.subr.mxu0 0.0
        %358 = vmatpush1.msra.mxu0 0.0
        %359 = vmatprep.subr.mxu0 0.0
        %360 = vmatpush1.msra.mxu0 0.0
        %361 = vmatprep.subr.mxu0 0.0
        %362 = vmatpush1.msra.mxu0 0.0
        %363 = vmatprep.subr.mxu0 0.0
        %364 = vmatpush1.msra.mxu0 0.0
        %365 = vmatprep.subr.mxu0 0.0
        %366 = vmatpush1.msra.mxu0 0.0
        %367 = vmatprep.subr.mxu0 0.0
        %368 = vmatpush1.msra.mxu0 0.0
        %369 = vmatprep.subr.mxu0 0.0
        %370 = vmatpush1.msra.mxu0 0.0
        %371 = vmatprep.subr.mxu0 0.0
        %372 = vmatpush1.msra.mxu0 0.0
        %373 = vmatprep.subr.mxu0 0.0
        %374 = vmatpush1.msra.mxu0 0.0
        %375 = vmatprep.subr.mxu0 0.0
        %376 = vmatpush1.msra.mxu0 0.0
        %377 = vmatprep.subr.mxu0 0.0
        %378 = vmatpush1.msra.mxu0 0.0
        %379 = vmatprep.mubr.f32.mxu0 0.0
        %v380 = vand.u32 %v291, 4294901760
        %v381 = vsub.f32 %v291, %v380
        %v382 = vand.u32 %v381, 4294901760
        %v383 = vsub.f32 %v381, %v382
        %v384 = vand.u32 %v383, 4294901760
        %385 = vmatmul.mubr.f32.gmra.mrb[0].mxu0 %v384
        %v386 = vpop.f32.mrb[0].mxu0
        %v387 = vadd.f32 %v287, %v386
        %v388 = vpop.f32.mrb[0].mxu0
        %389 = vmatprep.mubr.f32.mxu0 0.0
        %v390 = vand.u32 %v294, 4294901760
        %v391 = vsub.f32 %v294, %v390
        %v392 = vand.u32 %v391, 4294901760
        %v393 = vsub.f32 %v391, %v392
        %v394 = vand.u32 %v393, 4294901760
        %395 = vmatmul.mubr.f32.gmra.mrb[0].mxu0 %v394
        %v396 = vpop.f32.mrb[0].mxu0
        %v397 = vadd.f32 %v287, %v396
        %v398 = vpop.f32.mrb[0].mxu0
        %399 = vmatprep.mubr.f32.mxu0 0.0
        %v400 = vand.u32 %v297, 4294901760
        %v401 = vsub.f32 %v297, %v400
        %v402 = vand.u32 %v401, 4294901760
        %v403 = vsub.f32 %v401, %v402
        %v404 = vand.u32 %v403, 4294901760
        %405 = vmatmul.mubr.f32.gmra.mrb[0].mxu0 %v404
        %v406 = vpop.f32.mrb[0].mxu0
        %v407 = vadd.f32 %v287, %v406
        %v408 = vpop.f32.mrb[0].mxu0
        %409 = vmatprep.mubr.f32.mxu0 0.0
        %v410 = vand.u32 %v300, 4294901760
        %v411 = vsub.f32 %v300, %v410
        %v412 = vand.u32 %v411, 4294901760
        %v413 = vsub.f32 %v411, %v412
        %v414 = vand.u32 %v413, 4294901760
        %415 = vmatmul.mubr.f32.gmra.mrb[0].mxu0 %v414
        %v416 = vpop.f32.mrb[0].mxu0
        %v417 = vadd.f32 %v287, %v416
        %v418 = vpop.f32.mrb[0].mxu0
        %419 = vmatprep.mubr.f32.mxu0 0.0
        %v420 = vand.u32 %v303, 4294901760
        %v421 = vsub.f32 %v303, %v420
        %v422 = vand.u32 %v421, 4294901760
        %v423 = vsub.f32 %v421, %v422
        %v424 = vand.u32 %v423, 4294901760
        %425 = vmatmul.mubr.f32.gmra.mrb[0].mxu0 %v424
        %v426 = vpop.f32.mrb[0].mxu0
        %v427 = vadd.f32 %v287, %v426
        %v428 = vpop.f32.mrb[0].mxu0
        %429 = vmatprep.mubr.f32.mxu0 0.0
        %v430 = vand.u32 %v306, 4294901760
        %v431 = vsub.f32 %v306, %v430
        %v432 = vand.u32 %v431, 4294901760
        %v433 = vsub.f32 %v431, %v432
        %v434 = vand.u32 %v433, 4294901760
        %435 = vmatmul.mubr.f32.gmra.mrb[0].mxu0 %v434
        %v436 = vpop.f32.mrb[0].mxu0
        %v437 = vadd.f32 %v287, %v436
        %v438 = vpop.f32.mrb[0].mxu0
        %439 = vmatprep.mubr.f32.mxu0 0.0
        %v440 = vand.u32 %v309, 4294901760
        %v441 = vsub.f32 %v309, %v440
        %v442 = vand.u32 %v441, 4294901760
        %v443 = vsub.f32 %v441, %v442
        %v444 = vand.u32 %v443, 4294901760
        %445 = vmatmul.mubr.f32.gmra.mrb[0].mxu0 %v444
        %v446 = vpop.f32.mrb[0].mxu0
        %v447 = vadd.f32 %v287, %v446
        %v448 = vpop.f32.mrb[0].mxu0
        %449 = vmatprep.mubr.f32.mxu0 0.0
        %v450 = vand.u32 %v312, 4294901760
        %v451 = vsub.f32 %v312, %v450
        %v452 = vand.u32 %v451, 4294901760
        %v453 = vsub.f32 %v451, %v452
        %v454 = vand.u32 %v453, 4294901760
        %455 = vmatmul.mubr.f32.gmra.mrb[0].mxu0 %v454
        %v456 = vpop.f32.mrb[0].mxu0
        %v457 = vadd.f32 %v287, %v456
        %v458 = vpop.f32.mrb[0].mxu0
        %459 = vdwg.mxu0
        %460 = vmatprep.subr.mxu0 0.0
        %v461 = vand.u32 %v282, 4294901760
        %v462 = vsub.f32 %v282, %v461
        %v463 = vand.u32 %v462, 4294901760
        %v464 = vsub.f32 %v462, %v463
        %v465 = vand.u32 %v464, 4294901760
        %466 = vmatpush1.msra.mxu0 %v465
        %467 = vmatprep.subr.mxu0 0.0
        %468 = vmatpush1.msra.mxu0 0.0
        %469 = vmatprep.subr.mxu0 0.0
        %470 = vmatpush1.msra.mxu0 0.0
        %471 = vmatprep.subr.mxu0 0.0
        %472 = vmatpush1.msra.mxu0 0.0
        %473 = vmatprep.subr.mxu0 0.0
        %474 = vmatpush1.msra.mxu0 0.0
        %475 = vmatprep.subr.mxu0 0.0
        %476 = vmatpush1.msra.mxu0 0.0
        %477 = vmatprep.subr.mxu0 0.0
        %478 = vmatpush1.msra.mxu0 0.0
        %479 = vmatprep.subr.mxu0 0.0
        %480 = vmatpush1.msra.mxu0 0.0
        %481 = vmatprep.subr.mxu0 0.0
        %482 = vmatpush1.msra.mxu0 0.0
        %483 = vmatprep.subr.mxu0 0.0
        %484 = vmatpush1.msra.mxu0 0.0
        %485 = vmatprep.subr.mxu0 0.0
        %486 = vmatpush1.msra.mxu0 0.0
        %487 = vmatprep.subr.mxu0 0.0
        %488 = vmatpush1.msra.mxu0 0.0
        %489 = vmatprep.subr.mxu0 0.0
        %490 = vmatpush1.msra.mxu0 0.0
        %491 = vmatprep.subr.mxu0 0.0
        %492 = vmatpush1.msra.mxu0 0.0
        %493 = vmatprep.subr.mxu0 0.0
        %494 = vmatpush1.msra.mxu0 0.0
        %495 = vmatprep.subr.mxu0 0.0
        %496 = vmatpush1.msra.mxu0 0.0
        %497 = vmatprep.subr.mxu0 0.0
        %498 = vmatpush1.msra.mxu0 0.0
        %499 = vmatprep.subr.mxu0 0.0
        %500 = vmatpush1.msra.mxu0 0.0
        %501 = vmatprep.subr.mxu0 0.0
        %502 = vmatpush1.msra.mxu0 0.0
        %503 = vmatprep.subr.mxu0 0.0
        %504 = vmatpush1.msra.mxu0 0.0
        %505 = vmatprep.subr.mxu0 0.0
        %506 = vmatpush1.msra.mxu0 0.0
        %507 = vmatprep.subr.mxu0 0.0
        %508 = vmatpush1.msra.mxu0 0.0
        %509 = vmatprep.subr.mxu0 0.0
        %510 = vmatpush1.msra.mxu0 0.0
        %511 = vmatprep.subr.mxu0 0.0
        %512 = vmatpush1.msra.mxu0 0.0
        %513 = vmatprep.subr.mxu0 0.0
        %514 = vmatpush1.msra.mxu0 0.0
        %515 = vmatprep.subr.mxu0 0.0
        %516 = vmatpush1.msra.mxu0 0.0
        %517 = vmatprep.subr.mxu0 0.0
        %518 = vmatpush1.msra.mxu0 0.0
        %519 = vmatprep.subr.mxu0 0.0
        %520 = vmatpush1.msra.mxu0 0.0
        %521 = vmatprep.subr.mxu0 0.0
        %522 = vmatpush1.msra.mxu0 0.0
        %523 = vmatprep.subr.mxu0 0.0
        %524 = vmatpush1.msra.mxu0 0.0
        %525 = vmatprep.subr.mxu0 0.0
        %526 = vmatpush1.msra.mxu0 0.0
        %527 = vmatprep.subr.mxu0 0.0
        %528 = vmatpush1.msra.mxu0 0.0
        %529 = vmatprep.mubr.f32.mxu0 0.0
        %v530 = vand.u32 %v291, 4294901760
        %531 = vmatmul.mubr.f32.gmra.mrb[0].mxu0 %v530
        %v532 = vpop.f32.mrb[0].mxu0
        %v533 = vadd.f32 %v387, %v532
        %v534 = vpop.f32.mrb[0].mxu0
        %535 = vmatprep.mubr.f32.mxu0 0.0
        %v536 = vand.u32 %v294, 4294901760
        %537 = vmatmul.mubr.f32.gmra.mrb[0].mxu0 %v536
        %v538 = vpop.f32.mrb[0].mxu0
        %v539 = vadd.f32 %v397, %v538
        %v540 = vpop.f32.mrb[0].mxu0
        %541 = vmatprep.mubr.f32.mxu0 0.0
        %v542 = vand.u32 %v297, 4294901760
        %543 = vmatmul.mubr.f32.gmra.mrb[0].mxu0 %v542
        %v544 = vpop.f32.mrb[0].mxu0
        %v545 = vadd.f32 %v407, %v544
        %v546 = vpop.f32.mrb[0].mxu0
        %547 = vmatprep.mubr.f32.mxu0 0.0
        %v548 = vand.u32 %v300, 4294901760
        %549 = vmatmul.mubr.f32.gmra.mrb[0].mxu0 %v548
        %v550 = vpop.f32.mrb[0].mxu0
        %v551 = vadd.f32 %v417, %v550
        %v552 = vpop.f32.mrb[0].mxu0
        %553 = vmatprep.mubr.f32.mxu0 0.0
        %v554 = vand.u32 %v303, 4294901760
        %555 = vmatmul.mubr.f32.gmra.mrb[0].mxu0 %v554
        %v556 = vpop.f32.mrb[0].mxu0
        %v557 = vadd.f32 %v427, %v556
        %v558 = vpop.f32.mrb[0].mxu0
        %559 = vmatprep.mubr.f32.mxu0 0.0
        %v560 = vand.u32 %v306, 4294901760
        %561 = vmatmul.mubr.f32.gmra.mrb[0].mxu0 %v560
        %v562 = vpop.f32.mrb[0].mxu0
        %v563 = vadd.f32 %v437, %v562
        %v564 = vpop.f32.mrb[0].mxu0
        %565 = vmatprep.mubr.f32.mxu0 0.0
        %v566 = vand.u32 %v309, 4294901760
        %567 = vmatmul.mubr.f32.gmra.mrb[0].mxu0 %v566
        %v568 = vpop.f32.mrb[0].mxu0
        %v569 = vadd.f32 %v447, %v568
        %v570 = vpop.f32.mrb[0].mxu0
        %571 = vmatprep.mubr.f32.mxu0 0.0
        %v572 = vand.u32 %v312, 4294901760
        %573 = vmatmul.mubr.f32.gmra.mrb[0].mxu0 %v572
        %v574 = vpop.f32.mrb[0].mxu0
        %v575 = vadd.f32 %v457, %v574
        %v576 = vpop.f32.mrb[0].mxu0
        %577 = vdwg.mxu0
        %578 = vmatprep.subr.mxu0 0.0
        %v579 = vand.u32 %v282, 4294901760
        %v580 = vsub.f32 %v282, %v579
        %581 = vmatpush1.msra.mxu0 %v580
        %582 = vmatprep.subr.mxu0 0.0
        %583 = vmatpush1.msra.mxu0 0.0
        %584 = vmatprep.subr.mxu0 0.0
        %585 = vmatpush1.msra.mxu0 0.0
        %586 = vmatprep.subr.mxu0 0.0
        %587 = vmatpush1.msra.mxu0 0.0
        %588 = vmatprep.subr.mxu0 0.0
        %589 = vmatpush1.msra.mxu0 0.0
        %590 = vmatprep.subr.mxu0 0.0
        %591 = vmatpush1.msra.mxu0 0.0
        %592 = vmatprep.subr.mxu0 0.0
        %593 = vmatpush1.msra.mxu0 0.0
        %594 = vmatprep.subr.mxu0 0.0
        %595 = vmatpush1.msra.mxu0 0.0
        %596 = vmatprep.subr.mxu0 0.0
        %597 = vmatpush1.msra.mxu0 0.0
        %598 = vmatprep.subr.mxu0 0.0
        %599 = vmatpush1.msra.mxu0 0.0
        %600 = vmatprep.subr.mxu0 0.0
        %601 = vmatpush1.msra.mxu0 0.0
        %602 = vmatprep.subr.mxu0 0.0
        %603 = vmatpush1.msra.mxu0 0.0
        %604 = vmatprep.subr.mxu0 0.0
        %605 = vmatpush1.msra.mxu0 0.0
        %606 = vmatprep.subr.mxu0 0.0
        %607 = vmatpush1.msra.mxu0 0.0
        %608 = vmatprep.subr.mxu0 0.0
        %609 = vmatpush1.msra.mxu0 0.0
        %610 = vmatprep.subr.mxu0 0.0
        %611 = vmatpush1.msra.mxu0 0.0
        %612 = vmatprep.subr.mxu0 0.0
        %613 = vmatpush1.msra.mxu0 0.0
        %614 = vmatprep.subr.mxu0 0.0
        %615 = vmatpush1.msra.mxu0 0.0
        %616 = vmatprep.subr.mxu0 0.0
        %617 = vmatpush1.msra.mxu0 0.0
        %618 = vmatprep.subr.mxu0 0.0
        %619 = vmatpush1.msra.mxu0 0.0
        %620 = vmatprep.subr.mxu0 0.0
        %621 = vmatpush1.msra.mxu0 0.0
        %622 = vmatprep.subr.mxu0 0.0
        %623 = vmatpush1.msra.mxu0 0.0
        %624 = vmatprep.subr.mxu0 0.0
        %625 = vmatpush1.msra.mxu0 0.0
        %626 = vmatprep.subr.mxu0 0.0
        %627 = vmatpush1.msra.mxu0 0.0
        %628 = vmatprep.subr.mxu0 0.0
        %629 = vmatpush1.msra.mxu0 0.0
        %630 = vmatprep.subr.mxu0 0.0
        %631 = vmatpush1.msra.mxu0 0.0
        %632 = vmatprep.subr.mxu0 0.0
        %633 = vmatpush1.msra.mxu0 0.0
        %634 = vmatprep.subr.mxu0 0.0
        %635 = vmatpush1.msra.mxu0 0.0
        %636 = vmatprep.subr.mxu0 0.0
        %637 = vmatpush1.msra.mxu0 0.0
        %638 = vmatprep.subr.mxu0 0.0
        %639 = vmatpush1.msra.mxu0 0.0
        %640 = vmatprep.subr.mxu0 0.0
        %641 = vmatpush1.msra.mxu0 0.0
        %642 = vmatprep.subr.mxu0 0.0
        %643 = vmatpush1.msra.mxu0 0.0
        %644 = vmatprep.mubr.f32.mxu0 0.0
        %v645 = vand.u32 %v291, 4294901760
        %v646 = vsub.f32 %v291, %v645
        %647 = vmatmul.mubr.f32.gmra.mrb[0].mxu0 %v646
        %v648 = vpop.f32.mrb[0].mxu0
        %v649 = vadd.f32 %v533, %v648
        %v650 = vpop.f32.mrb[0].mxu0
        %651 = vmatprep.mubr.f32.mxu0 0.0
        %v652 = vand.u32 %v294, 4294901760
        %v653 = vsub.f32 %v294, %v652
        %654 = vmatmul.mubr.f32.gmra.mrb[0].mxu0 %v653
        %v655 = vpop.f32.mrb[0].mxu0
        %v656 = vadd.f32 %v539, %v655
        %v657 = vpop.f32.mrb[0].mxu0
        %658 = vmatprep.mubr.f32.mxu0 0.0
        %v659 = vand.u32 %v297, 4294901760
        %v660 = vsub.f32 %v297, %v659
        %661 = vmatmul.mubr.f32.gmra.mrb[0].mxu0 %v660
        %v662 = vpop.f32.mrb[0].mxu0
        %v663 = vadd.f32 %v545, %v662
        %v664 = vpop.f32.mrb[0].mxu0
        %665 = vmatprep.mubr.f32.mxu0 0.0
        %v666 = vand.u32 %v300, 4294901760
        %v667 = vsub.f32 %v300, %v666
        %668 = vmatmul.mubr.f32.gmra.mrb[0].mxu0 %v667
        %v669 = vpop.f32.mrb[0].mxu0
        %v670 = vadd.f32 %v551, %v669
        %v671 = vpop.f32.mrb[0].mxu0
        %672 = vmatprep.mubr.f32.mxu0 0.0
        %v673 = vand.u32 %v303, 4294901760
        %v674 = vsub.f32 %v303, %v673
        %675 = vmatmul.mubr.f32.gmra.mrb[0].mxu0 %v674
        %v676 = vpop.f32.mrb[0].mxu0
        %v677 = vadd.f32 %v557, %v676
        %v678 = vpop.f32.mrb[0].mxu0
        %679 = vmatprep.mubr.f32.mxu0 0.0
        %v680 = vand.u32 %v306, 4294901760
        %v681 = vsub.f32 %v306, %v680
        %682 = vmatmul.mubr.f32.gmra.mrb[0].mxu0 %v681
        %v683 = vpop.f32.mrb[0].mxu0
        %v684 = vadd.f32 %v563, %v683
        %v685 = vpop.f32.mrb[0].mxu0
        %686 = vmatprep.mubr.f32.mxu0 0.0
        %v687 = vand.u32 %v309, 4294901760
        %v688 = vsub.f32 %v309, %v687
        %689 = vmatmul.mubr.f32.gmra.mrb[0].mxu0 %v688
        %v690 = vpop.f32.mrb[0].mxu0
        %v691 = vadd.f32 %v569, %v690
        %v692 = vpop.f32.mrb[0].mxu0
        %693 = vmatprep.mubr.f32.mxu0 0.0
        %v694 = vand.u32 %v312, 4294901760
        %v695 = vsub.f32 %v312, %v694
        %696 = vmatmul.mubr.f32.gmra.mrb[0].mxu0 %v695
        %v697 = vpop.f32.mrb[0].mxu0
        %v698 = vadd.f32 %v575, %v697
        %v699 = vpop.f32.mrb[0].mxu0
        %700 = vdwg.mxu0
        %701 = vmatprep.subr.mxu0 0.0
        %v702 = vand.u32 %v282, 4294901760
        %703 = vmatpush1.msra.mxu0 %v702
        %704 = vmatprep.subr.mxu0 0.0
        %705 = vmatpush1.msra.mxu0 0.0
        %706 = vmatprep.subr.mxu0 0.0
        %707 = vmatpush1.msra.mxu0 0.0
        %708 = vmatprep.subr.mxu0 0.0
        %709 = vmatpush1.msra.mxu0 0.0
        %710 = vmatprep.subr.mxu0 0.0
        %711 = vmatpush1.msra.mxu0 0.0
        %712 = vmatprep.subr.mxu0 0.0
        %713 = vmatpush1.msra.mxu0 0.0
        %714 = vmatprep.subr.mxu0 0.0
        %715 = vmatpush1.msra.mxu0 0.0
        %716 = vmatprep.subr.mxu0 0.0
        %717 = vmatpush1.msra.mxu0 0.0
        %718 = vmatprep.subr.mxu0 0.0
        %719 = vmatpush1.msra.mxu0 0.0
        %720 = vmatprep.subr.mxu0 0.0
        %721 = vmatpush1.msra.mxu0 0.0
        %722 = vmatprep.subr.mxu0 0.0
        %723 = vmatpush1.msra.mxu0 0.0
        %724 = vmatprep.subr.mxu0 0.0
        %725 = vmatpush1.msra.mxu0 0.0
        %726 = vmatprep.subr.mxu0 0.0
        %727 = vmatpush1.msra.mxu0 0.0
        %728 = vmatprep.subr.mxu0 0.0
        %729 = vmatpush1.msra.mxu0 0.0
        %730 = vmatprep.subr.mxu0 0.0
        %731 = vmatpush1.msra.mxu0 0.0
        %732 = vmatprep.subr.mxu0 0.0
        %733 = vmatpush1.msra.mxu0 0.0
        %734 = vmatprep.subr.mxu0 0.0
        %735 = vmatpush1.msra.mxu0 0.0
        %736 = vmatprep.subr.mxu0 0.0
        %737 = vmatpush1.msra.mxu0 0.0
        %738 = vmatprep.subr.mxu0 0.0
        %739 = vmatpush1.msra.mxu0 0.0
        %740 = vmatprep.subr.mxu0 0.0
        %741 = vmatpush1.msra.mxu0 0.0
        %742 = vmatprep.subr.mxu0 0.0
        %743 = vmatpush1.msra.mxu0 0.0
        %744 = vmatprep.subr.mxu0 0.0
        %745 = vmatpush1.msra.mxu0 0.0
        %746 = vmatprep.subr.mxu0 0.0
        %747 = vmatpush1.msra.mxu0 0.0
        %748 = vmatprep.subr.mxu0 0.0
        %749 = vmatpush1.msra.mxu0 0.0
        %750 = vmatprep.subr.mxu0 0.0
        %751 = vmatpush1.msra.mxu0 0.0
        %752 = vmatprep.subr.mxu0 0.0
        %753 = vmatpush1.msra.mxu0 0.0
        %754 = vmatprep.subr.mxu0 0.0
        %755 = vmatpush1.msra.mxu0 0.0
        %756 = vmatprep.subr.mxu0 0.0
        %757 = vmatpush1.msra.mxu0 0.0
        %758 = vmatprep.subr.mxu0 0.0
        %759 = vmatpush1.msra.mxu0 0.0
        %760 = vmatprep.subr.mxu0 0.0
        %761 = vmatpush1.msra.mxu0 0.0
        %762 = vmatprep.subr.mxu0 0.0
        %763 = vmatpush1.msra.mxu0 0.0
        %764 = vmatprep.subr.mxu0 0.0
        %765 = vmatpush1.msra.mxu0 0.0
        %766 = vmatprep.mubr.f32.mxu0 0.0
        %v767 = vand.u32 %v291, 4294901760
        %v768 = vsub.f32 %v291, %v767
        %v769 = vand.u32 %v768, 4294901760
        %770 = vmatmul.mubr.f32.gmra.mrb[0].mxu0 %v769
        %v771 = vpop.f32.mrb[0].mxu0
        %v772 = vadd.f32 %v649, %v771
        %v773 = vpop.f32.mrb[0].mxu0
        %774 = vmatprep.mubr.f32.mxu0 0.0
        %v775 = vand.u32 %v294, 4294901760
        %v776 = vsub.f32 %v294, %v775
        %v777 = vand.u32 %v776, 4294901760
        %778 = vmatmul.mubr.f32.gmra.mrb[0].mxu0 %v777
        %v779 = vpop.f32.mrb[0].mxu0
        %v780 = vadd.f32 %v656, %v779
        %v781 = vpop.f32.mrb[0].mxu0
        %782 = vmatprep.mubr.f32.mxu0 0.0
        %v783 = vand.u32 %v297, 4294901760
        %v784 = vsub.f32 %v297, %v783
        %v785 = vand.u32 %v784, 4294901760
        %786 = vmatmul.mubr.f32.gmra.mrb[0].mxu0 %v785
        %v787 = vpop.f32.mrb[0].mxu0
        %v788 = vadd.f32 %v663, %v787
        %v789 = vpop.f32.mrb[0].mxu0
        %790 = vmatprep.mubr.f32.mxu0 0.0
        %v791 = vand.u32 %v300, 4294901760
        %v792 = vsub.f32 %v300, %v791
        %v793 = vand.u32 %v792, 4294901760
        %794 = vmatmul.mubr.f32.gmra.mrb[0].mxu0 %v793
        %v795 = vpop.f32.mrb[0].mxu0
        %v796 = vadd.f32 %v670, %v795
        %v797 = vpop.f32.mrb[0].mxu0
        %798 = vmatprep.mubr.f32.mxu0 0.0
        %v799 = vand.u32 %v303, 4294901760
        %v800 = vsub.f32 %v303, %v799
        %v801 = vand.u32 %v800, 4294901760
        %802 = vmatmul.mubr.f32.gmra.mrb[0].mxu0 %v801
        %v803 = vpop.f32.mrb[0].mxu0
        %v804 = vadd.f32 %v677, %v803
        %v805 = vpop.f32.mrb[0].mxu0
        %806 = vmatprep.mubr.f32.mxu0 0.0
        %v807 = vand.u32 %v306, 4294901760
        %v808 = vsub.f32 %v306, %v807
        %v809 = vand.u32 %v808, 4294901760
        %810 = vmatmul.mubr.f32.gmra.mrb[0].mxu0 %v809
        %v811 = vpop.f32.mrb[0].mxu0
        %v812 = vadd.f32 %v684, %v811
        %v813 = vpop.f32.mrb[0].mxu0
        %814 = vmatprep.mubr.f32.mxu0 0.0
        %v815 = vand.u32 %v309, 4294901760
        %v816 = vsub.f32 %v309, %v815
        %v817 = vand.u32 %v816, 4294901760
        %818 = vmatmul.mubr.f32.gmra.mrb[0].mxu0 %v817
        %v819 = vpop.f32.mrb[0].mxu0
        %v820 = vadd.f32 %v691, %v819
        %v821 = vpop.f32.mrb[0].mxu0
        %822 = vmatprep.mubr.f32.mxu0 0.0
        %v823 = vand.u32 %v312, 4294901760
        %v824 = vsub.f32 %v312, %v823
        %v825 = vand.u32 %v824, 4294901760
        %826 = vmatmul.mubr.f32.gmra.mrb[0].mxu0 %v825
        %v827 = vpop.f32.mrb[0].mxu0
        %v828 = vadd.f32 %v698, %v827
        %v829 = vpop.f32.mrb[0].mxu0
        %830 = vdwg.mxu0
        %831 = vmatprep.subr.mxu0 0.0
        %v832 = vand.u32 %v282, 4294901760
        %v833 = vsub.f32 %v282, %v832
        %v834 = vand.u32 %v833, 4294901760
        %835 = vmatpush1.msra.mxu0 %v834
        %836 = vmatprep.subr.mxu0 0.0
        %837 = vmatpush1.msra.mxu0 0.0
        %838 = vmatprep.subr.mxu0 0.0
        %839 = vmatpush1.msra.mxu0 0.0
        %840 = vmatprep.subr.mxu0 0.0
        %841 = vmatpush1.msra.mxu0 0.0
        %842 = vmatprep.subr.mxu0 0.0
        %843 = vmatpush1.msra.mxu0 0.0
        %844 = vmatprep.subr.mxu0 0.0
        %845 = vmatpush1.msra.mxu0 0.0
        %846 = vmatprep.subr.mxu0 0.0
        %847 = vmatpush1.msra.mxu0 0.0
        %848 = vmatprep.subr.mxu0 0.0
        %849 = vmatpush1.msra.mxu0 0.0
        %850 = vmatprep.subr.mxu0 0.0
        %851 = vmatpush1.msra.mxu0 0.0
        %852 = vmatprep.subr.mxu0 0.0
        %853 = vmatpush1.msra.mxu0 0.0
        %854 = vmatprep.subr.mxu0 0.0
        %855 = vmatpush1.msra.mxu0 0.0
        %856 = vmatprep.subr.mxu0 0.0
        %857 = vmatpush1.msra.mxu0 0.0
        %858 = vmatprep.subr.mxu0 0.0
        %859 = vmatpush1.msra.mxu0 0.0
        %860 = vmatprep.subr.mxu0 0.0
        %861 = vmatpush1.msra.mxu0 0.0
        %862 = vmatprep.subr.mxu0 0.0
        %863 = vmatpush1.msra.mxu0 0.0
        %864 = vmatprep.subr.mxu0 0.0
        %865 = vmatpush1.msra.mxu0 0.0
        %866 = vmatprep.subr.mxu0 0.0
        %867 = vmatpush1.msra.mxu0 0.0
        %868 = vmatprep.subr.mxu0 0.0
        %869 = vmatpush1.msra.mxu0 0.0
        %870 = vmatprep.subr.mxu0 0.0
        %871 = vmatpush1.msra.mxu0 0.0
        %872 = vmatprep.subr.mxu0 0.0
        %873 = vmatpush1.msra.mxu0 0.0
        %874 = vmatprep.subr.mxu0 0.0
        %875 = vmatpush1.msra.mxu0 0.0
        %876 = vmatprep.subr.mxu0 0.0
        %877 = vmatpush1.msra.mxu0 0.0
        %878 = vmatprep.subr.mxu0 0.0
        %879 = vmatpush1.msra.mxu0 0.0
        %880 = vmatprep.subr.mxu0 0.0
        %881 = vmatpush1.msra.mxu0 0.0
        %882 = vmatprep.subr.mxu0 0.0
        %883 = vmatpush1.msra.mxu0 0.0
        %884 = vmatprep.subr.mxu0 0.0
        %885 = vmatpush1.msra.mxu0 0.0
        %886 = vmatprep.subr.mxu0 0.0
        %887 = vmatpush1.msra.mxu0 0.0
        %888 = vmatprep.subr.mxu0 0.0
        %889 = vmatpush1.msra.mxu0 0.0
        %890 = vmatprep.subr.mxu0 0.0
        %891 = vmatpush1.msra.mxu0 0.0
        %892 = vmatprep.subr.mxu0 0.0
        %893 = vmatpush1.msra.mxu0 0.0
        %894 = vmatprep.subr.mxu0 0.0
        %895 = vmatpush1.msra.mxu0 0.0
        %896 = vmatprep.subr.mxu0 0.0
        %897 = vmatpush1.msra.mxu0 0.0
        %898 = vmatprep.mubr.f32.mxu0 0.0
        %v899 = vand.u32 %v291, 4294901760
        %900 = vmatmul.mubr.f32.gmra.mrb[0].mxu0 %v899
        %v901 = vpop.f32.mrb[0].mxu0
        %v902 = vadd.f32 %v772, %v901
        %v903 = vpop.f32.mrb[0].mxu0
        %904 = vmatprep.mubr.f32.mxu0 0.0
        %v905 = vand.u32 %v294, 4294901760
        %906 = vmatmul.mubr.f32.gmra.mrb[0].mxu0 %v905
        %v907 = vpop.f32.mrb[0].mxu0
        %v908 = vadd.f32 %v780, %v907
        %v909 = vpop.f32.mrb[0].mxu0
        %910 = vmatprep.mubr.f32.mxu0 0.0
        %v911 = vand.u32 %v297, 4294901760
        %912 = vmatmul.mubr.f32.gmra.mrb[0].mxu0 %v911
        %v913 = vpop.f32.mrb[0].mxu0
        %v914 = vadd.f32 %v788, %v913
        %v915 = vpop.f32.mrb[0].mxu0
        %916 = vmatprep.mubr.f32.mxu0 0.0
        %v917 = vand.u32 %v300, 4294901760
        %918 = vmatmul.mubr.f32.gmra.mrb[0].mxu0 %v917
        %v919 = vpop.f32.mrb[0].mxu0
        %v920 = vadd.f32 %v796, %v919
        %v921 = vpop.f32.mrb[0].mxu0
        %922 = vmatprep.mubr.f32.mxu0 0.0
        %v923 = vand.u32 %v303, 4294901760
        %924 = vmatmul.mubr.f32.gmra.mrb[0].mxu0 %v923
        %v925 = vpop.f32.mrb[0].mxu0
        %v926 = vadd.f32 %v804, %v925
        %v927 = vpop.f32.mrb[0].mxu0
        %928 = vmatprep.mubr.f32.mxu0 0.0
        %v929 = vand.u32 %v306, 4294901760
        %930 = vmatmul.mubr.f32.gmra.mrb[0].mxu0 %v929
        %v931 = vpop.f32.mrb[0].mxu0
        %v932 = vadd.f32 %v812, %v931
        %v933 = vpop.f32.mrb[0].mxu0
        %934 = vmatprep.mubr.f32.mxu0 0.0
        %v935 = vand.u32 %v309, 4294901760
        %936 = vmatmul.mubr.f32.gmra.mrb[0].mxu0 %v935
        %v937 = vpop.f32.mrb[0].mxu0
        %v938 = vadd.f32 %v820, %v937
        %v939 = vpop.f32.mrb[0].mxu0
        %940 = vmatprep.mubr.f32.mxu0 0.0
        %v941 = vand.u32 %v312, 4294901760
        %942 = vmatmul.mubr.f32.gmra.mrb[0].mxu0 %v941
        %v943 = vpop.f32.mrb[0].mxu0
        %v944 = vadd.f32 %v828, %v943
        %v945 = vpop.f32.mrb[0].mxu0
        %946 = vdwg.mxu0
        %947 = vmatprep.subr.mxu0 0.0
        %v948 = vand.u32 %v282, 4294901760
        %949 = vmatpush1.msra.mxu0 %v948
        %950 = vmatprep.subr.mxu0 0.0
        %951 = vmatpush1.msra.mxu0 0.0
        %952 = vmatprep.subr.mxu0 0.0
        %953 = vmatpush1.msra.mxu0 0.0
        %954 = vmatprep.subr.mxu0 0.0
        %955 = vmatpush1.msra.mxu0 0.0
        %956 = vmatprep.subr.mxu0 0.0
        %957 = vmatpush1.msra.mxu0 0.0
        %958 = vmatprep.subr.mxu0 0.0
        %959 = vmatpush1.msra.mxu0 0.0
        %960 = vmatprep.subr.mxu0 0.0
        %961 = vmatpush1.msra.mxu0 0.0
        %962 = vmatprep.subr.mxu0 0.0
        %963 = vmatpush1.msra.mxu0 0.0
        %964 = vmatprep.subr.mxu0 0.0
        %965 = vmatpush1.msra.mxu0 0.0
        %966 = vmatprep.subr.mxu0 0.0
        %967 = vmatpush1.msra.mxu0 0.0
        %968 = vmatprep.subr.mxu0 0.0
        %969 = vmatpush1.msra.mxu0 0.0
        %970 = vmatprep.subr.mxu0 0.0
        %971 = vmatpush1.msra.mxu0 0.0
        %972 = vmatprep.subr.mxu0 0.0
        %973 = vmatpush1.msra.mxu0 0.0
        %974 = vmatprep.subr.mxu0 0.0
        %975 = vmatpush1.msra.mxu0 0.0
        %976 = vmatprep.subr.mxu0 0.0
        %977 = vmatpush1.msra.mxu0 0.0
        %978 = vmatprep.subr.mxu0 0.0
        %979 = vmatpush1.msra.mxu0 0.0
        %980 = vmatprep.subr.mxu0 0.0
        %981 = vmatpush1.msra.mxu0 0.0
        %982 = vmatprep.subr.mxu0 0.0
        %983 = vmatpush1.msra.mxu0 0.0
        %984 = vmatprep.subr.mxu0 0.0
        %985 = vmatpush1.msra.mxu0 0.0
        %986 = vmatprep.subr.mxu0 0.0
        %987 = vmatpush1.msra.mxu0 0.0
        %988 = vmatprep.subr.mxu0 0.0
        %989 = vmatpush1.msra.mxu0 0.0
        %990 = vmatprep.subr.mxu0 0.0
        %991 = vmatpush1.msra.mxu0 0.0
        %992 = vmatprep.subr.mxu0 0.0
        %993 = vmatpush1.msra.mxu0 0.0
        %994 = vmatprep.subr.mxu0 0.0
        %995 = vmatpush1.msra.mxu0 0.0
        %996 = vmatprep.subr.mxu0 0.0
        %997 = vmatpush1.msra.mxu0 0.0
        %998 = vmatprep.subr.mxu0 0.0
        %999 = vmatpush1.msra.mxu0 0.0
        %1000 = vmatprep.subr.mxu0 0.0
        %1001 = vmatpush1.msra.mxu0 0.0
        %1002 = vmatprep.subr.mxu0 0.0
        %1003 = vmatpush1.msra.mxu0 0.0
        %1004 = vmatprep.subr.mxu0 0.0
        %1005 = vmatpush1.msra.mxu0 0.0
        %1006 = vmatprep.subr.mxu0 0.0
        %1007 = vmatpush1.msra.mxu0 0.0
        %1008 = vmatprep.subr.mxu0 0.0
        %1009 = vmatpush1.msra.mxu0 0.0
        %1010 = vmatprep.subr.mxu0 0.0
        %1011 = vmatpush1.msra.mxu0 0.0
        %1012 = vmatprep.mubr.f32.mxu0 0.0
        %v1013 = vand.u32 %v291, 4294901760
        %1014 = vmatmul.mubr.f32.gmra.mrb[0].mxu0 %v1013
        %v1015 = vpop.f32.mrb[0].mxu0
        %v1016 = vadd.f32 %v902, %v1015
        %v1017 = vpop.f32.mrb[0].mxu0
        %1018 = vmatprep.mubr.f32.mxu0 0.0
        %v1019 = vand.u32 %v294, 4294901760
        %1020 = vmatmul.mubr.f32.gmra.mrb[0].mxu0 %v1019
        %v1021 = vpop.f32.mrb[0].mxu0
        %v1022 = vadd.f32 %v908, %v1021
        %v1023 = vpop.f32.mrb[0].mxu0
        %1024 = vmatprep.mubr.f32.mxu0 0.0
        %v1025 = vand.u32 %v297, 4294901760
        %1026 = vmatmul.mubr.f32.gmra.mrb[0].mxu0 %v1025
        %v1027 = vpop.f32.mrb[0].mxu0
        %v1028 = vadd.f32 %v914, %v1027
        %v1029 = vpop.f32.mrb[0].mxu0
        %1030 = vmatprep.mubr.f32.mxu0 0.0
        %v1031 = vand.u32 %v300, 4294901760
        %1032 = vmatmul.mubr.f32.gmra.mrb[0].mxu0 %v1031
        %v1033 = vpop.f32.mrb[0].mxu0
        %v1034 = vadd.f32 %v920, %v1033
        %v1035 = vpop.f32.mrb[0].mxu0
        %1036 = vmatprep.mubr.f32.mxu0 0.0
        %v1037 = vand.u32 %v303, 4294901760
        %1038 = vmatmul.mubr.f32.gmra.mrb[0].mxu0 %v1037
        %v1039 = vpop.f32.mrb[0].mxu0
        %v1040 = vadd.f32 %v926, %v1039
        %v1041 = vpop.f32.mrb[0].mxu0
        %1042 = vmatprep.mubr.f32.mxu0 0.0
        %v1043 = vand.u32 %v306, 4294901760
        %1044 = vmatmul.mubr.f32.gmra.mrb[0].mxu0 %v1043
        %v1045 = vpop.f32.mrb[0].mxu0
        %v1046 = vadd.f32 %v932, %v1045
        %v1047 = vpop.f32.mrb[0].mxu0
        %1048 = vmatprep.mubr.f32.mxu0 0.0
        %v1049 = vand.u32 %v309, 4294901760
        %1050 = vmatmul.mubr.f32.gmra.mrb[0].mxu0 %v1049
        %v1051 = vpop.f32.mrb[0].mxu0
        %v1052 = vadd.f32 %v938, %v1051
        %v1053 = vpop.f32.mrb[0].mxu0
        %1054 = vmatprep.mubr.f32.mxu0 0.0
        %v1055 = vand.u32 %v312, 4294901760
        %1056 = vmatmul.mubr.f32.gmra.mrb[0].mxu0 %v1055
        %v1057 = vpop.f32.mrb[0].mxu0
        %v1058 = vadd.f32 %v944, %v1057
        %v1059 = vpop.f32.mrb[0].mxu0
        %1060 = vdwg.mxu0
        %v1061 = vld [vmem:[%s227] sm:$0xff]
        %v1062 = vld [vmem:[%s227 + $0x10] sm:$0xff]
        %v1063 = vld [vmem:[%s227 + $0x20] sm:$0xff]
        %v1064 = vld [vmem:[%s227 + $0x30] sm:$0xff]
        %v1065 = vld [vmem:[%s227 + $0x40] sm:$0xff]
        %v1066 = vld [vmem:[%s227 + $0x50] sm:$0xff]
        %v1067 = vld [vmem:[%s227 + $0x60] sm:$0xff]
        %v1068 = vld [vmem:[%s227 + $0x70] sm:$0xff]
        %v1069 = vadd.f32 %v1061, %v1016
        %v1070 = vadd.f32 %v1062, %v1022
        %v1071 = vadd.f32 %v1063, %v1028
        %v1072 = vadd.f32 %v1064, %v1034
        %v1073 = vadd.f32 %v1065, %v1040
        %v1074 = vadd.f32 %v1066, %v1046
        %v1075 = vadd.f32 %v1067, %v1052
        %v1076 = vadd.f32 %v1068, %v1058
        %1077 = vst.msk [vmem:[%s260] sm:$0xff] %vm289, %v1069
        %1078 = vst.msk [vmem:[%s260 + $0x10] sm:$0xff] %vm289, %v1070
        %1079 = vst.msk [vmem:[%s260 + $0x20] sm:$0xff] %vm289, %v1071
        %1080 = vst.msk [vmem:[%s260 + $0x30] sm:$0xff] %vm289, %v1072
        %1081 = vst.msk [vmem:[%s260 + $0x40] sm:$0xff] %vm289, %v1073
        %1082 = vst.msk [vmem:[%s260 + $0x50] sm:$0xff] %vm289, %v1074
        %1083 = vst.msk [vmem:[%s260 + $0x60] sm:$0xff] %vm289, %v1075
        %1084 = vst.msk [vmem:[%s260 + $0x70] sm:$0xff] %vm289, %v1076
        %s1085 = scalar_lea.vmem %s227, 8 [#allocation2]
        %v1086 = vld [vmem:[%s1085] sm:$0xff]
        %v1087 = vld [vmem:[%s1085 + $0x10] sm:$0xff]
        %v1088 = vld [vmem:[%s1085 + $0x20] sm:$0xff]
        %v1089 = vld [vmem:[%s1085 + $0x30] sm:$0xff]
        %v1090 = vld [vmem:[%s1085 + $0x40] sm:$0xff]
        %v1091 = vld [vmem:[%s1085 + $0x50] sm:$0xff]
        %v1092 = vld [vmem:[%s1085 + $0x60] sm:$0xff]
        %v1093 = vld [vmem:[%s1085 + $0x70] sm:$0xff]
        %1102 = vrot.lane.b32.xlu0 %v1016, 120
        %v1103 = vpop.permute.xlu0 %1102
        %1104 = vrot.lane.b32.xlu0 %v1022, 120
        %v1105 = vpop.permute.xlu0 %1104
        %1106 = vrot.lane.b32.xlu0 %v1028, 120
        %v1107 = vpop.permute.xlu0 %1106
        %1108 = vrot.lane.b32.xlu0 %v1034, 120
        %v1109 = vpop.permute.xlu0 %1108
        %1110 = vrot.lane.b32.xlu0 %v1040, 120
        %v1111 = vpop.permute.xlu0 %1110
        %1112 = vrot.lane.b32.xlu0 %v1046, 120
        %v1113 = vpop.permute.xlu0 %1112
        %1114 = vrot.lane.b32.xlu0 %v1052, 120
        %v1115 = vpop.permute.xlu0 %1114
        %1116 = vrot.lane.b32.xlu0 %v1058, 120
        %v1117 = vpop.permute.xlu0 %1116
        %v1126 = vadd.f32 %v1086, %v1103
        %v1127 = vadd.f32 %v1087, %v1105
        %v1128 = vadd.f32 %v1088, %v1107
        %v1129 = vadd.f32 %v1089, %v1109
        %v1130 = vadd.f32 %v1090, %v1111
        %v1131 = vadd.f32 %v1091, %v1113
        %v1132 = vadd.f32 %v1092, %v1115
        %v1133 = vadd.f32 %v1093, %v1117
        %s1134 = scalar_lea.vmem %s260, 8 [#allocation5]
        %1135 = vst.msk [vmem:[%s1134] sm:$0xff] %vm289, %v1126
        %1136 = vst.msk [vmem:[%s1134 + $0x10] sm:$0xff] %vm289, %v1127
        %1137 = vst.msk [vmem:[%s1134 + $0x20] sm:$0xff] %vm289, %v1128
        %1138 = vst.msk [vmem:[%s1134 + $0x30] sm:$0xff] %vm289, %v1129
        %1139 = vst.msk [vmem:[%s1134 + $0x40] sm:$0xff] %vm289, %v1130
        %1140 = vst.msk [vmem:[%s1134 + $0x50] sm:$0xff] %vm289, %v1131
        %1141 = vst.msk [vmem:[%s1134 + $0x60] sm:$0xff] %vm289, %v1132
        %1142 = vst.msk [vmem:[%s1134 + $0x70] sm:$0xff] %vm289, %v1133
        %s1143 = sand.u32 %s141, 1
        %s1144 = scalar_lea.sflag [#allocation4], %s1143
        %s1145 = sand.u32 %s141, 1
        %s1146 = smul.addr %s1145, 128
        %s1147 = scalar_lea.vmem [#allocation5], %s1146
        // Predicated region
        $region41: #{tpu_custom_call.1} parent=35 // pred_check
          %p1148 = pneg %p151
        $region42: #{tpu_custom_call.1} parent=35 // pred_check_branch
          %1150 = sbr.rel (%p1148) target = $region44
        $region43: #{tpu_custom_call.1} parent=35 // pred_region
          %s1151 = smul.u32 8, %s26
          %s1153 = ssub.s32 2048, 2048
          %1154 = vsyncadd %s1144, %s1153
          %s1155 = smul.addr %s1151, 2
          %s1156 = smul.addr %s25, 16
          %s1157 = sadd.s32 %s1155, %s1156
          %s1158 = smul.addr %s1157, 128
          %s1159 = scalar_lea.hbm %s4, %s1158
          %s1160 = sshll.u32 %s1147, 4
          %s1161 = int_to_ptr.vmem [resolvable:$true] %s1160
          %1166 = dma.vmem_to_hbm [thread:$0]  %s1161, 2048, %s1159, %s1144, 128, 128, 8
        $region44: #{tpu_custom_call.1} parent=35 // pred_fallthru
          _
      $region36: #{tpu_custom_call.1} parent=5 // pred_fallthru
        _
      %p1167 = scmp.le.s32.totalorder 2, %s16
      // Predicated region
      $region45: #{tpu_custom_call.1} parent=5 // pred_check
        %p1168 = pneg %p1167
      $region46: #{tpu_custom_call.1} parent=5 // pred_check_branch
        %1170 = sbr.rel (%p1168) target = $region48
      $region47: #{tpu_custom_call.1} parent=5 // pred_region
        %s1171 = ssub.s32 %s16, 2
        // Predicated region
        $region49: #{tpu_custom_call.1} parent=47 // pred_check
          %p1172 = pneg %p157
        $region50: #{tpu_custom_call.1} parent=47 // pred_check_branch
          %1174 = sbr.rel (%p1172) target = $region52
        $region51: #{tpu_custom_call.1} parent=47 // pred_region
          %s1175 = sand.u32 %s142, 1
          %s1176 = scalar_lea.sflag [#allocation4], %s1175
          %s1177 = sand.u32 %s142, 1
          %s1178 = smul.addr %s1177, 128
          %s1179 = scalar_lea.vmem [#allocation5], %s1178
          %1180 = dma.done %s1176, 2048
        $region52: #{tpu_custom_call.1} parent=47 // pred_fallthru
          _
      $region48: #{tpu_custom_call.1} parent=5 // pred_fallthru
        _
    $region6: #{tpu_custom_call.1} parent=1 // loop_footer
      %s20 = sadd.s32 1, %s16
    $region7: #{tpu_custom_call.1} parent=1 // loop_footer_branch
      %15 = sbr.rel target = $region3
    $region8: #{tpu_custom_call.1} parent=1 // loop_exit
      _
    %1181 = vsyncpa [#allocation3], 1
    %s1182 = scalar_lea.sflag [#allocation3], 1
    %1183 = vsyncpa %s1182, 1
    %1184 = vsyncpa [#allocation4], 1
    %s1185 = scalar_lea.sflag [#allocation4], 1
    %1186 = vsyncpa %s1185, 1

</llo_original>
